<compile_context>
chip_gen: v7x
topology: tpu7x:2x2x1
jax: 0.10.0
libtpu: 0.0.40
codegen_flags: <defaults>
</compile_context>

<pallas_src>
import functools
import math

import jax
import jax.numpy as jnp
import numpy as np
from jax.experimental import pallas as pl
from jax.experimental.pallas import tpu as pltpu

_LANE = 128
_SUBLANE = 8


def _round_up(x, m):
    return ((x + m - 1) // m) * m


def _padded_bytes(shape, itemsize):
    """Bytes of a VMEM-resident block after (8, 128) tile padding."""
    shape = tuple(int(s) for s in shape)
    if len(shape) == 1:
        shape = (1,) + shape
    lead, (s, l) = shape[:-2], shape[-2:]
    n = _round_up(s, _SUBLANE) * _round_up(l, _LANE)
    for d in lead:
        n *= d
    return n * itemsize


# ----------------------------------------------------------------------------
# Pallas kernel: one sample tile, static level-batched schedule.
# ----------------------------------------------------------------------------
def _cgnn_level_kernel(init_ref, w1_ref, w2_ref, b2_ref, x_ref,
                       *, levels, hidden, r_pad, weight_dtype):
    """x_ref (R_pad, TN) is the fused state for this sample tile:
         row 0        : ones  (layer-1 bias lane)
         rows 1 .. D  : node rows in level order; seeded with the node's own
                        noise and overwritten in place by its generated value.
    Parents live in strictly earlier levels, so the causal prefix of X already
    holds generated values when a level reads it; the level's own rows still
    hold its noise (the folded weight's own-noise column picks that up).
    """
    H = hidden
    x_ref[...] = init_ref[...]                      # seed ones + noise (all finite)
    for s, L in levels:                             # static host-side schedule
        # Causal prefix: ones row + all node rows up to and incl. this level,
        # rounded up to a lane multiple (extra weight columns are exactly 0).
        k = min(_round_up(1 + s + L, _LANE), r_pad)
        xs = x_ref[:k, :].astype(weight_dtype)
        # Layer 1 for the whole level: one (L*H, k) @ (k, TN) MXU matmul
        # (parent gather + own noise + bias all folded into w1).
        h = jnp.dot(w1_ref[s * H:(s + L) * H, :k], xs,
                    preferred_element_type=jnp.float32)          # (L*H, TN)
        h = jnp.maximum(h, 0.0).astype(weight_dtype)             # ReLU in f32
        # Layer 2 for the whole level: block-diagonal (L, L*H) @ (L*H, TN).
        pred = jnp.dot(w2_ref[s:s + L, :L * H], h,
                       preferred_element_type=jnp.float32)       # (L, TN)
        pred = pred + b2_ref[s:s + L, :]
        x_ref[1 + s:1 + s + L, :] = pred            # overwrite this level's rows


# ----------------------------------------------------------------------------
# Host-side: level schedule + dense folding of the per-node MLPs.
# ----------------------------------------------------------------------------
def compute_levels(parent_indices):
    """Topological levels.  Returns (perm, pos, levels):
       perm[k] = original node at level-ordered position k,
       pos[i]  = level-ordered position of original node i,
       levels  = tuple of (start, size) per level (level-ordered positions)."""
    D = len(parent_indices)
    level = [0] * D
    for i, ps in enumerate(parent_indices):
        # The original module's forward loop implicitly assumes node order ==
        # topological order; keep that contract.
        assert all(p < i for p in ps), "node order must be topological"
        level[i] = 0 if not ps else max(level[p] for p in ps) + 1
    perm = sorted(range(D), key=lambda i: (level[i], i))
    pos = [0] * D
    for k, i in enumerate(perm):
        pos[i] = k
    levels, start = [], 0
    for lv in range(max(level) + 1):
        size = sum(1 for x in level if x == lv)
        levels.append((start, size))
        start += size
    return perm, pos, tuple(levels)


def build_raw_params(parent_indices, hidden_size, key):
    """Per-node params matching nn.Linear(p+1,H) / ReLU / nn.Linear(H,1)."""
    raw = []
    for parents in parent_indices:
        fan_in1 = len(parents) + 1
        k1, k2, k3, k4, key = jax.random.split(key, 5)
        bnd1 = 1.0 / math.sqrt(fan_in1)
        bnd2 = 1.0 / math.sqrt(hidden_size)
        W1 = jax.random.uniform(k1, (hidden_size, fan_in1), jnp.float32, -bnd1, bnd1)
        b1 = jax.random.uniform(k2, (hidden_size,), jnp.float32, -bnd1, bnd1)
        W2 = jax.random.uniform(k3, (1, hidden_size), jnp.float32, -bnd2, bnd2)
        b2 = jax.random.uniform(k4, (1,), jnp.float32, -bnd2, bnd2)
        raw.append((W1, b1, W2, b2))
    return raw


def fold_params(parent_indices, raw_params, hidden_size):
    """Fold per-node MLPs into level-batched dense slabs (NumPy, host-side).

      w1 : (D*H, R_pad)  rows k*H:(k+1)*H belong to the node at level-ordered
                         position k; column 0 = b1, column 1+pos[parent] =
                         parent weight, column 1+k = own-noise weight.
      w2 : (D, Lmax*H)   per-level block-diagonal layer-2 rows.
      b2 : (D, 1)
    """
    D, H = len(parent_indices), hidden_size
    perm, pos, levels = compute_levels(parent_indices)
    lmax = max(sz for _, sz in levels)
    r_pad = _round_up(1 + D, _SUBLANE)

    w1 = np.zeros((D * H, r_pad), np.float32)
    w2 = np.zeros((D, lmax * H), np.float32)
    b2 = np.zeros((D, 1), np.float32)

    start_of = {}
    for s, sz in levels:
        for k in range(s, s + sz):
            start_of[k] = s

    for k, i in enumerate(perm):
        W1, b1, W2, b2v = (np.asarray(a, np.float32) for a in raw_params[i])
        rows = slice(k * H, (k + 1) * H)
        w1[rows, 0] = b1
        for j, par in enumerate(parent_indices[i]):
            w1[rows, 1 + pos[par]] = W1[:, j]
        w1[rows, 1 + k] = W1[:, len(parent_indices[i])]   # own-noise column
        jloc = k - start_of[k]
        w2[k, jloc * H:(jloc + 1) * H] = W2[0, :]
        b2[k, 0] = b2v[0]

    return dict(num_nodes=D, hidden=H, perm=perm, pos=pos, levels=levels,
                r_pad=r_pad, lmax=lmax, w1=w1, w2=w2, b2=b2)


# ----------------------------------------------------------------------------
# Wrapper
# ----------------------------------------------------------------------------
def cgnn_generate(noise, plan, *, tile_n=512, weight_dtype=jnp.float32):
    """CGNN forward.  noise: (N, D) f32 in original node order -> (N, D) f32."""
    N, D = noise.shape
    assert D == plan["num_nodes"]
    H, r_pad, levels = plan["hidden"], plan["r_pad"], plan["levels"]
    perm = np.asarray(plan["perm"])
    pos = np.asarray(plan["pos"])

    # Lane-dense layout: pad samples to a multiple of 128 and tile them.
    n_pad = _round_up(N, _LANE)
    tn = min(_round_up(tile_n, _LANE), n_pad)
    n_pad = _round_up(n_pad, tn)
    num_tiles = n_pad // tn

    # Fused init state: row 0 = ones, rows 1..D = the node's own noise (level
    # order); padding rows/columns are zero (all finite, matching zero weights).
    init = np.zeros((r_pad, n_pad), np.float32)
    init[0, :] = 1.0
    noise_t = np.asarray(noise, np.float32).T          # (D, N), original order
    init[1:1 + D, :N] = noise_t[perm]                  # level-ordered rows

    w1 = jnp.asarray(plan["w1"], weight_dtype)
    w2 = jnp.asarray(plan["w2"], weight_dtype)
    b2 = jnp.asarray(plan["b2"], jnp.float32)
    init = jnp.asarray(init)

    kernel = functools.partial(_cgnn_level_kernel, levels=levels, hidden=H,
                               r_pad=r_pad, weight_dtype=weight_dtype)

    # Scoped-VMEM request sized against this chip's capacity (no hard 64 MiB
    # cap): 2x the per-step blocks + headroom, floored at 16 MiB.
    blocks = [(w1.shape, w1.dtype.itemsize), (w2.shape, w2.dtype.itemsize),
              (b2.shape, 4), ((r_pad, tn), 4), ((r_pad, tn), 4)]
    need = 2 * sum(_padded_bytes(s, it) for s, it in blocks) + (4 << 20)
    try:
        cap = int(pltpu.get_tpu_info().vmem_capacity_bytes)
    except Exception:
        cap = 64 << 20
    vmem_limit = int(min(max(need, 16 << 20), int(cap * 0.9)))

    out = pl.pallas_call(
        kernel,
        out_shape=jax.ShapeDtypeStruct((r_pad, n_pad), jnp.float32),
        grid=(num_tiles,),
        in_specs=[
            pl.BlockSpec((r_pad, tn), lambda j: (0, j)),   # init state, per N-tile
            pl.BlockSpec(w1.shape, lambda j: (0, 0)),      # constant: fetched once
            pl.BlockSpec(w2.shape, lambda j: (0, 0)),
            pl.BlockSpec(b2.shape, lambda j: (0, 0)),
        ],
        out_specs=pl.BlockSpec((r_pad, tn), lambda j: (0, j)),
        compiler_params=pltpu.CompilerParams(
            dimension_semantics=("parallel",),             # sample tiles independent
            vmem_limit_bytes=vmem_limit),
    )(init, w1, w2, b2)

    gen_perm = out[1:1 + D, :N]            # (D, N), level order
    gen_t = gen_perm[jnp.asarray(pos)]     # back to original node order
    return jnp.transpose(gen_t)            # (N, D)


# ----------------------------------------------------------------------------
# Pure-JAX reference (mirrors the PyTorch forward loop exactly).
# ----------------------------------------------------------------------------
def cgnn_reference(noise, parent_indices, raw_params):
    N, D = noise.shape
    gen = jnp.zeros((N, D), jnp.float32)
    for i in range(D):
        parents = parent_indices[i]
        if len(parents) > 0:
            par_cols = gen[:, jnp.array(parents, dtype=jnp.int32)]
        else:
            par_cols = jnp.zeros((N, 0), jnp.float32)
        inps = jnp.concatenate([par_cols, noise[:, i:i + 1]], axis=1)
        W1, b1, W2, b2 = raw_params[i]
        h = jnp.maximum(inps @ W1.T + b1, 0.0)
        pred = h @ W2.T + b2
        gen = gen.at[:, i:i + 1].set(pred)
    return gen


# ----------------------------------------------------------------------------
if __name__ == "__main__":
    key = jax.random.PRNGKey(0)

    # --- Test 1: diamond DAG 0->1, 0->2, 1->3, 2->3 (node order == topo) ----
    parent_indices = [[], [0], [0], [1, 2]]
    hidden_size = 32
    n_samples = 200           # not a multiple of 128: exercises lane padding

    key, k_noise, k_params = jax.random.split(key, 3)
    noise = jax.random.normal(k_noise, (n_samples, len(parent_indices)), jnp.float32)
    raw_params = build_raw_params(parent_indices, hidden_size, k_params)
    plan = fold_params(parent_indices, raw_params, hidden_size)

    generated = jax.block_until_ready(cgnn_generate(noise, plan, tile_n=512))
    expected = cgnn_reference(noise, parent_indices, raw_params)
    assert generated.shape == (n_samples, len(parent_indices))
    assert jnp.allclose(generated, expected, atol=1e-3, rtol=1e-3), (
        "f32 kernel output mismatch vs reference")

    # bf16-weight variant (f32 accumulation) — looser tolerance.
    gen_bf16 = jax.block_until_ready(
        cgnn_generate(noise, plan, tile_n=512, weight_dtype=jnp.bfloat16))
    assert jnp.allclose(gen_bf16, expected, atol=1.5e-1, rtol=1e-1), (
        "bf16 kernel output mismatch vs reference")

    # --- Test 2: DAG whose level order permutes node order + multi N-tile grid
    parent_indices2 = [[], [0], [], [1, 2], [2]]
    hidden2 = 16
    n_samples2 = 300
    key, k_noise2, k_params2 = jax.random.split(key, 3)
    noise2 = jax.random.normal(k_noise2, (n_samples2, len(parent_indices2)), jnp.float32)
    raw_params2 = build_raw_params(parent_indices2, hidden2, k_params2)
    plan2 = fold_params(parent_indices2, raw_params2, hidden2)

    generated2 = jax.block_until_ready(cgnn_generate(noise2, plan2, tile_n=128))
    expected2 = cgnn_reference(noise2, parent_indices2, raw_params2)
    assert generated2.shape == (n_samples2, len(parent_indices2))
    assert jnp.allclose(generated2, expected2, atol=1e-3, rtol=1e-3), (
        "permuted-level kernel output mismatch vs reference")

    print("KERNEL_OK")
</pallas_src>

<mosaic_0001>
module attributes {stable_mosaic.version = 11 : i64} {
  func.func @_cgnn_level_kernel(%arg0: i32, %arg1: memref<8x256xf32, #tpu.memory_space<vmem>>, %arg2: memref<128x8xf32, #tpu.memory_space<vmem>>, %arg3: memref<4x64xf32, #tpu.memory_space<vmem>>, %arg4: memref<4x1xf32, #tpu.memory_space<vmem>>, %arg5: memref<8x256xf32, #tpu.memory_space<vmem>>) attributes {dimension_semantics = [#tpu.dimension_semantics<parallel>], iteration_bounds = array<i64: 1>, scalar_prefetch = 0 : i64, scratch_operands = 0 : i64, tpu.core_type = #tpu.core_type<tc>, window_params = [{transform_indices = @transform_0, window_bounds = array<i64: 8, 256>}, {pipeline_mode = #tpu.pipeline_mode<synchronous>, transform_indices = @transform_1, window_bounds = array<i64: 128, 8>}, {pipeline_mode = #tpu.pipeline_mode<synchronous>, transform_indices = @transform_2, window_bounds = array<i64: 4, 64>}, {pipeline_mode = #tpu.pipeline_mode<synchronous>, transform_indices = @transform_3, window_bounds = array<i64: 4, 1>}, {transform_indices = @transform_4, window_bounds = array<i64: 8, 256>}]} {
    %c0 = arith.constant 0 : index
    %c0_0 = arith.constant 0 : index
    %0 = vector.load %arg1[%c0, %c0_0] : memref<8x256xf32, #tpu.memory_space<vmem>>, vector<8x256xf32>
    %c0_1 = arith.constant 0 : index
    %c0_2 = arith.constant 0 : index
    %1 = vector.load %arg5[%c0_1, %c0_2] : memref<8x256xf32, #tpu.memory_space<vmem>>, vector<8x256xf32>
    tpu.vector_store %arg5[%c0_1, %c0_2], %0 {strides = array<i32>} : memref<8x256xf32, #tpu.memory_space<vmem>>, vector<8x256xf32>,
    %c0_3 = arith.constant 0 : index
    %c0_4 = arith.constant 0 : index
    %2 = vector.load %arg5[%c0_3, %c0_4] : memref<8x256xf32, #tpu.memory_space<vmem>>, vector<8x256xf32>
    %c0_5 = arith.constant 0 : index
    %c0_6 = arith.constant 0 : index
    %3 = vector.load %arg2[%c0_5, %c0_6] : memref<128x8xf32, #tpu.memory_space<vmem>>, vector<32x8xf32>
    %cst = arith.constant dense<0.000000e+00> : vector<32x256xf32>
    %4 = tpu.matmul %3, %2, %cst {dimension_numbers = #tpu.dot_dimension_numbers<[1], [0], [0], [1], [0, 0, 1, 1], [], []>} : vector<32x8xf32>, vector<8x256xf32>, vector<32x256xf32> -> vector<32x256xf32>
    %cst_7 = arith.constant 0.000000e+00 : f32
    %5 = vector.broadcast %cst_7 : f32 to vector<32x256xf32>
    %6 = arith.maximumf %4, %5 : vector<32x256xf32>
    %c0_8 = arith.constant 0 : index
    %c0_9 = arith.constant 0 : index
    %7 = vector.load %arg3[%c0_8, %c0_9] : memref<4x64xf32, #tpu.memory_space<vmem>>, vector<1x32xf32>
    %cst_10 = arith.constant dense<0.000000e+00> : vector<1x256xf32>
    %8 = tpu.matmul %7, %6, %cst_10 {dimension_numbers = #tpu.dot_dimension_numbers<[1], [0], [0], [1], [0, 0, 1, 1], [], []>} : vector<1x32xf32>, vector<32x256xf32>, vector<1x256xf32> -> vector<1x256xf32>
    %c0_11 = arith.constant 0 : index
    %c0_12 = arith.constant 0 : index
    %9 = vector.load %arg4[%c0_11, %c0_12] : memref<4x1xf32, #tpu.memory_space<vmem>>, vector<1x1xf32>
    %10 = vector.broadcast %9 : vector<1x1xf32> to vector<1x256xf32>
    %11 = arith.addf %8, %10 : vector<1x256xf32>
    %c1 = arith.constant 1 : index
    %c0_13 = arith.constant 0 : index
    %12 = vector.load %arg5[%c1, %c0_13] : memref<8x256xf32, #tpu.memory_space<vmem>>, vector<1x256xf32>
    tpu.vector_store %arg5[%c1, %c0_13], %11 {strides = array<i32>} : memref<8x256xf32, #tpu.memory_space<vmem>>, vector<1x256xf32>,
    %c0_14 = arith.constant 0 : index
    %c0_15 = arith.constant 0 : index
    %13 = vector.load %arg5[%c0_14, %c0_15] : memref<8x256xf32, #tpu.memory_space<vmem>>, vector<8x256xf32>
    %c32 = arith.constant 32 : index
    %c0_16 = arith.constant 0 : index
    %14 = vector.load %arg2[%c32, %c0_16] : memref<128x8xf32, #tpu.memory_space<vmem>>, vector<64x8xf32>
    %cst_17 = arith.constant dense<0.000000e+00> : vector<64x256xf32>
    %15 = tpu.matmul %14, %13, %cst_17 {dimension_numbers = #tpu.dot_dimension_numbers<[1], [0], [0], [1], [0, 0, 1, 1], [], []>} : vector<64x8xf32>, vector<8x256xf32>, vector<64x256xf32> -> vector<64x256xf32>
    %cst_18 = arith.constant 0.000000e+00 : f32
    %16 = vector.broadcast %cst_18 : f32 to vector<64x256xf32>
    %17 = arith.maximumf %15, %16 : vector<64x256xf32>
    %c1_19 = arith.constant 1 : index
    %c0_20 = arith.constant 0 : index
    %18 = vector.load %arg3[%c1_19, %c0_20] : memref<4x64xf32, #tpu.memory_space<vmem>>, vector<2x64xf32>
    %cst_21 = arith.constant dense<0.000000e+00> : vector<2x256xf32>
    %19 = tpu.matmul %18, %17, %cst_21 {dimension_numbers = #tpu.dot_dimension_numbers<[1], [0], [0], [1], [0, 0, 1, 1], [], []>} : vector<2x64xf32>, vector<64x256xf32>, vector<2x256xf32> -> vector<2x256xf32>
    %c1_22 = arith.constant 1 : index
    %c0_23 = arith.constant 0 : index
    %20 = vector.load %arg4[%c1_22, %c0_23] : memref<4x1xf32, #tpu.memory_space<vmem>>, vector<2x1xf32>
    %21 = vector.broadcast %20 : vector<2x1xf32> to vector<2x256xf32>
    %22 = arith.addf %19, %21 : vector<2x256xf32>
    %c2 = arith.constant 2 : index
    %c0_24 = arith.constant 0 : index
    %23 = vector.load %arg5[%c2, %c0_24] : memref<8x256xf32, #tpu.memory_space<vmem>>, vector<2x256xf32>
    tpu.vector_store %arg5[%c2, %c0_24], %22 {strides = array<i32>} : memref<8x256xf32, #tpu.memory_space<vmem>>, vector<2x256xf32>,
    %c0_25 = arith.constant 0 : index
    %c0_26 = arith.constant 0 : index
    %24 = vector.load %arg5[%c0_25, %c0_26] : memref<8x256xf32, #tpu.memory_space<vmem>>, vector<8x256xf32>
    %c96 = arith.constant 96 : index
    %c0_27 = arith.constant 0 : index
    %25 = vector.load %arg2[%c96, %c0_27] : memref<128x8xf32, #tpu.memory_space<vmem>>, vector<32x8xf32>
    %cst_28 = arith.constant dense<0.000000e+00> : vector<32x256xf32>
    %26 = tpu.matmul %25, %24, %cst_28 {dimension_numbers = #tpu.dot_dimension_numbers<[1], [0], [0], [1], [0, 0, 1, 1], [], []>} : vector<32x8xf32>, vector<8x256xf32>, vector<32x256xf32> -> vector<32x256xf32>
    %cst_29 = arith.constant 0.000000e+00 : f32
    %27 = vector.broadcast %cst_29 : f32 to vector<32x256xf32>
    %28 = arith.maximumf %26, %27 : vector<32x256xf32>
    %c3 = arith.constant 3 : index
    %c0_30 = arith.constant 0 : index
    %29 = vector.load %arg3[%c3, %c0_30] : memref<4x64xf32, #tpu.memory_space<vmem>>, vector<1x32xf32>
    %cst_31 = arith.constant dense<0.000000e+00> : vector<1x256xf32>
    %30 = tpu.matmul %29, %28, %cst_31 {dimension_numbers = #tpu.dot_dimension_numbers<[1], [0], [0], [1], [0, 0, 1, 1], [], []>} : vector<1x32xf32>, vector<32x256xf32>, vector<1x256xf32> -> vector<1x256xf32>
    %c3_32 = arith.constant 3 : index
    %c0_33 = arith.constant 0 : index
    %31 = vector.load %arg4[%c3_32, %c0_33] : memref<4x1xf32, #tpu.memory_space<vmem>>, vector<1x1xf32>
    %32 = vector.broadcast %31 : vector<1x1xf32> to vector<1x256xf32>
    %33 = arith.addf %30, %32 : vector<1x256xf32>
    %c4 = arith.constant 4 : index
    %c0_34 = arith.constant 0 : index
    %34 = vector.load %arg5[%c4, %c0_34] : memref<8x256xf32, #tpu.memory_space<vmem>>, vector<1x256xf32>
    tpu.vector_store %arg5[%c4, %c0_34], %33 {strides = array<i32>} : memref<8x256xf32, #tpu.memory_space<vmem>>, vector<1x256xf32>,
    return
  }
  func.func @transform_0(%arg0: i32) -> (i32, i32) {
    %c0_i32 = arith.constant 0 : i32
    %c0_i32_0 = arith.constant 0 : i32
    return %c0_i32, %arg0 : i32, i32
  }
  func.func @transform_1(%arg0: i32) -> (i32, i32) {
    %c0_i32 = arith.constant 0 : i32
    %c0_i32_0 = arith.constant 0 : i32
    %c0_i32_1 = arith.constant 0 : i32
    return %c0_i32, %c0_i32_0 : i32, i32
  }
  func.func @transform_2(%arg0: i32) -> (i32, i32) {
    %c0_i32 = arith.constant 0 : i32
    %c0_i32_0 = arith.constant 0 : i32
    %c0_i32_1 = arith.constant 0 : i32
    return %c0_i32, %c0_i32_0 : i32, i32
  }
  func.func @transform_3(%arg0: i32) -> (i32, i32) {
    %c0_i32 = arith.constant 0 : i32
    %c0_i32_0 = arith.constant 0 : i32
    %c0_i32_1 = arith.constant 0 : i32
    return %c0_i32, %c0_i32_0 : i32, i32
  }
  func.func @transform_4(%arg0: i32) -> (i32, i32) {
    %c0_i32 = arith.constant 0 : i32
    %c0_i32_0 = arith.constant 0 : i32
    return %c0_i32, %arg0 : i32, i32
  }
}

</mosaic_0001>

<llo_original>
// kernel: tpu_custom_call.1
$region0: #{tpu_custom_call.1}
  #allocation0 [shape = 'u32[]', space=smem, size = 0x4, offset = 0x4, fixed_abs, tag = 'smem constant byte address 0x4 - core index']
  #allocation1 [shape = 'u32[144,128]{1,0:T(1,128)}', space=vmem, size = 0x12000, scoped, tag = 'internal scratch']
  %s0 = inlined_call_operand.vmem [shape: f32[8,256], index: 0, kind: input, shape index: {}]
  %s1 = inlined_call_operand.vmem [shape: f32[128,8], index: 1, kind: input, shape index: {}]
  %s2 = inlined_call_operand.vmem [shape: f32[4,64], index: 2, kind: input, shape index: {}]
  %s3 = inlined_call_operand.vmem [shape: f32[4,1], index: 3, kind: input, shape index: {}]
  %s4 = inlined_call_operand.hbm [shape: f32[8,256], index: 4, kind: output, shape index: {}]
  %s5 = sld [smem:[#allocation0]]
  $region26: #{tpu_custom_call.1} parent=0
    _
  %s7 = ssub.s32 1, %s5
  %s8 = scalar_select 0, %s7, %s5
  $region1: #{tpu_custom_call.1} parent=0
    #allocation2 [shape = 'u8[8192]{0}', space=vmem, size = 0x2000, scoped, tag = 'output window, operand 0, single buffered']
    #allocation3 [shape = 's32[1]{0}', space=sflag, size = 0x4, scoped, tag = 'scoped memory for tpu_custom_call.1']
    %9 = vsyncpa [#allocation3], 0
    // Predicated region
    $region2: #{tpu_custom_call.1} parent=1 // pred_check
      _
    $region3: #{tpu_custom_call.1} parent=1 // pred_check_branch
      %11 = sbr.rel (0) target = $region5
    $region4: #{tpu_custom_call.1} parent=1 // pred_region
      _
    $region5: #{tpu_custom_call.1} parent=1 // pred_fallthru
      _
    // Predicated region
    $region6: #{tpu_custom_call.1} parent=1 // pred_check
      _
    $region7: #{tpu_custom_call.1} parent=1 // pred_check_branch
      %13 = sbr.rel (0) target = $region9
    $region8: #{tpu_custom_call.1} parent=1 // pred_region
      _
    $region9: #{tpu_custom_call.1} parent=1 // pred_fallthru
      _
    // Predicated region
    $region10: #{tpu_custom_call.1} parent=1 // pred_check
      _
    $region11: #{tpu_custom_call.1} parent=1 // pred_check_branch
      %15 = sbr.rel (0) target = $region13
    $region12: #{tpu_custom_call.1} parent=1 // pred_region
      _
    $region13: #{tpu_custom_call.1} parent=1 // pred_fallthru
      _
    // Predicated region
    $region14: #{tpu_custom_call.1} parent=1 // pred_check
      _
    $region15: #{tpu_custom_call.1} parent=1 // pred_check_branch
      %17 = sbr.rel (0) target = $region17
    $region16: #{tpu_custom_call.1} parent=1 // pred_region
      _
    $region17: #{tpu_custom_call.1} parent=1 // pred_fallthru
      _
    %v18 = vld [vmem:[%s0] sm:$0xff]
    %v19 = vld [vmem:[%s0 + $0x8] sm:$0xff]
    %20 = vst [vmem:[#allocation2] sm:$0xff] %v18
    %21 = vst [vmem:[#allocation2 + $0x8] sm:$0xff] %v19
    %v22 = vld [vmem:[#allocation2] sm:$0xff]
    %v23 = vld [vmem:[#allocation2 + $0x8] sm:$0xff]
    %v24 = vld [vmem:[%s1] sm:$0xff]
    %v25 = vld [vmem:[%s1 + $0x8] sm:$0xff]
    %v26 = vld [vmem:[%s1 + $0x10] sm:$0xff]
    %v27 = vld [vmem:[%s1 + $0x18] sm:$0xff]
    %vm28 = vcmask 64512
    %v30 = vsel %vm28, %v24, 0
    %v33 = vsel %vm28, %v25, 0
    %v36 = vsel %vm28, %v26, 0
    %v39 = vsel %vm28, %v27, 0
    %41 = vmatprep.subr.mxu0 %v23
    %42 = vmatpush1.msra.mxu0 %v22
    %43 = vmatprep.subr.mxu0 0.0
    %44 = vmatpush1.msra.mxu0 0.0
    %45 = vmatprep.subr.mxu0 0.0
    %46 = vmatpush1.msra.mxu0 0.0
    %47 = vmatprep.subr.mxu0 0.0
    %48 = vmatpush1.msra.mxu0 0.0
    %49 = vmatprep.subr.mxu0 0.0
    %50 = vmatpush1.msra.mxu0 0.0
    %51 = vmatprep.subr.mxu0 0.0
    %52 = vmatpush1.msra.mxu0 0.0
    %53 = vmatprep.subr.mxu0 0.0
    %54 = vmatpush1.msra.mxu0 0.0
    %55 = vmatprep.subr.mxu0 0.0
    %56 = vmatpush1.msra.mxu0 0.0
    %57 = vmatprep.subr.mxu0 0.0
    %58 = vmatpush1.msra.mxu0 0.0
    %59 = vmatprep.subr.mxu0 0.0
    %60 = vmatpush1.msra.mxu0 0.0
    %61 = vmatprep.subr.mxu0 0.0
    %62 = vmatpush1.msra.mxu0 0.0
    %63 = vmatprep.subr.mxu0 0.0
    %64 = vmatpush1.msra.mxu0 0.0
    %65 = vmatprep.subr.mxu0 0.0
    %66 = vmatpush1.msra.mxu0 0.0
    %67 = vmatprep.subr.mxu0 0.0
    %68 = vmatpush1.msra.mxu0 0.0
    %69 = vmatprep.subr.mxu0 0.0
    %70 = vmatpush1.msra.mxu0 0.0
    %71 = vmatprep.subr.mxu0 0.0
    %72 = vmatpush1.msra.mxu0 0.0
    %73 = vmatprep.subr.mxu0 0.0
    %74 = vmatpush1.msra.mxu0 0.0
    %75 = vmatprep.subr.mxu0 0.0
    %76 = vmatpush1.msra.mxu0 0.0
    %77 = vmatprep.subr.mxu0 0.0
    %78 = vmatpush1.msra.mxu0 0.0
    %79 = vmatprep.subr.mxu0 0.0
    %80 = vmatpush1.msra.mxu0 0.0
    %81 = vmatprep.subr.mxu0 0.0
    %82 = vmatpush1.msra.mxu0 0.0
    %83 = vmatprep.subr.mxu0 0.0
    %84 = vmatpush1.msra.mxu0 0.0
    %85 = vmatprep.subr.mxu0 0.0
    %86 = vmatpush1.msra.mxu0 0.0
    %87 = vmatprep.subr.mxu0 0.0
    %88 = vmatpush1.msra.mxu0 0.0
    %89 = vmatprep.subr.mxu0 0.0
    %90 = vmatpush1.msra.mxu0 0.0
    %91 = vmatprep.subr.mxu0 0.0
    %92 = vmatpush1.msra.mxu0 0.0
    %93 = vmatprep.subr.mxu0 0.0
    %94 = vmatpush1.msra.mxu0 0.0
    %95 = vmatprep.subr.mxu0 0.0
    %96 = vmatpush1.msra.mxu0 0.0
    %97 = vmatprep.subr.mxu0 0.0
    %98 = vmatpush1.msra.mxu0 0.0
    %99 = vmatprep.subr.mxu0 0.0
    %100 = vmatpush1.msra.mxu0 0.0
    %101 = vmatprep.subr.mxu0 0.0
    %102 = vmatpush1.msra.mxu0 0.0
    %103 = vmatprep.subr.mxu0 0.0
    %104 = vmatpush1.msra.mxu0 0.0
    %105 = vmatprep.mubr.f32.mxu0 0.0
    %106 = vmatmul.mubr.f32.gmra.mrb[0].mxu0 %v30
    %v107 = vpop.f32.mrb[0].mxu0
    %v108 = vadd.f32 0.0, %v107
    %v109 = vpop.f32.mrb[0].mxu0
    %v110 = vadd.f32 0.0, %v109
    %111 = vmatprep.mubr.f32.mxu0 0.0
    %112 = vmatmul.mubr.f32.gmra.mrb[0].mxu0 %v33
    %v113 = vpop.f32.mrb[0].mxu0
    %v114 = vadd.f32 0.0, %v113
    %v115 = vpop.f32.mrb[0].mxu0
    %v116 = vadd.f32 0.0, %v115
    %117 = vmatprep.mubr.f32.mxu0 0.0
    %118 = vmatmul.mubr.f32.gmra.mrb[0].mxu0 %v36
    %v119 = vpop.f32.mrb[0].mxu0
    %v120 = vadd.f32 0.0, %v119
    %v121 = vpop.f32.mrb[0].mxu0
    %v122 = vadd.f32 0.0, %v121
    %123 = vmatprep.mubr.f32.mxu0 0.0
    %124 = vmatmul.mubr.f32.gmra.mrb[0].mxu0 %v39
    %v125 = vpop.f32.mrb[0].mxu0
    %v126 = vadd.f32 0.0, %v125
    %v127 = vpop.f32.mrb[0].mxu0
    %v128 = vadd.f32 0.0, %v127
    %129 = vdwg.mxu0
    %v130 = vmax.f32 %v108, 0.0
    %v131 = vmax.f32 %v110, 0.0
    %v132 = vmax.f32 %v114, 0.0
    %v133 = vmax.f32 %v116, 0.0
    %v134 = vmax.f32 %v120, 0.0
    %v135 = vmax.f32 %v122, 0.0
    %v136 = vmax.f32 %v126, 0.0
    %v137 = vmax.f32 %v128, 0.0
    %v138 = vld [vmem:[%s2] sm:$0x1]
    %v139 = vld [vmem:[%s3] sm:$0x1]
    %141 = vset.pattern.permute.xlu0 0
    %142 = vperm.xlu0 %141, %v139
    %v143 = vpop.permute.xlu0 %142
    %vm145 = vcmask 261120
    %v147 = vsel %vm145, %v138, 0
    %149 = vmatprep.subr.mxu0 %v131
    %150 = vmatpush1.msra.mxu0 %v130
    %151 = vmatprep.subr.mxu0 %v133
    %152 = vmatpush1.msra.mxu0 %v132
    %153 = vmatprep.subr.mxu0 %v135
    %154 = vmatpush1.msra.mxu0 %v134
    %155 = vmatprep.subr.mxu0 %v137
    %156 = vmatpush1.msra.mxu0 %v136
    %157 = vmatprep.subr.mxu0 0.0
    %158 = vmatpush1.msra.mxu0 0.0
    %159 = vmatprep.subr.mxu0 0.0
    %160 = vmatpush1.msra.mxu0 0.0
    %161 = vmatprep.subr.mxu0 0.0
    %162 = vmatpush1.msra.mxu0 0.0
    %163 = vmatprep.subr.mxu0 0.0
    %164 = vmatpush1.msra.mxu0 0.0
    %165 = vmatprep.subr.mxu0 0.0
    %166 = vmatpush1.msra.mxu0 0.0
    %167 = vmatprep.subr.mxu0 0.0
    %168 = vmatpush1.msra.mxu0 0.0
    %169 = vmatprep.subr.mxu0 0.0
    %170 = vmatpush1.msra.mxu0 0.0
    %171 = vmatprep.subr.mxu0 0.0
    %172 = vmatpush1.msra.mxu0 0.0
    %173 = vmatprep.subr.mxu0 0.0
    %174 = vmatpush1.msra.mxu0 0.0
    %175 = vmatprep.subr.mxu0 0.0
    %176 = vmatpush1.msra.mxu0 0.0
    %177 = vmatprep.subr.mxu0 0.0
    %178 = vmatpush1.msra.mxu0 0.0
    %179 = vmatprep.subr.mxu0 0.0
    %180 = vmatpush1.msra.mxu0 0.0
    %181 = vmatprep.subr.mxu0 0.0
    %182 = vmatpush1.msra.mxu0 0.0
    %183 = vmatprep.subr.mxu0 0.0
    %184 = vmatpush1.msra.mxu0 0.0
    %185 = vmatprep.subr.mxu0 0.0
    %186 = vmatpush1.msra.mxu0 0.0
    %187 = vmatprep.subr.mxu0 0.0
    %188 = vmatpush1.msra.mxu0 0.0
    %189 = vmatprep.subr.mxu0 0.0
    %190 = vmatpush1.msra.mxu0 0.0
    %191 = vmatprep.subr.mxu0 0.0
    %192 = vmatpush1.msra.mxu0 0.0
    %193 = vmatprep.subr.mxu0 0.0
    %194 = vmatpush1.msra.mxu0 0.0
    %195 = vmatprep.subr.mxu0 0.0
    %196 = vmatpush1.msra.mxu0 0.0
    %197 = vmatprep.subr.mxu0 0.0
    %198 = vmatpush1.msra.mxu0 0.0
    %199 = vmatprep.subr.mxu0 0.0
    %200 = vmatpush1.msra.mxu0 0.0
    %201 = vmatprep.subr.mxu0 0.0
    %202 = vmatpush1.msra.mxu0 0.0
    %203 = vmatprep.subr.mxu0 0.0
    %204 = vmatpush1.msra.mxu0 0.0
    %205 = vmatprep.subr.mxu0 0.0
    %206 = vmatpush1.msra.mxu0 0.0
    %207 = vmatprep.subr.mxu0 0.0
    %208 = vmatpush1.msra.mxu0 0.0
    %209 = vmatprep.subr.mxu0 0.0
    %210 = vmatpush1.msra.mxu0 0.0
    %211 = vmatprep.subr.mxu0 0.0
    %212 = vmatpush1.msra.mxu0 0.0
    %213 = vmatprep.mubr.f32.mxu0 0.0
    %214 = vmatmul.mubr.f32.gmra.mrb[0].mxu0 %v147
    %v215 = vpop.f32.mrb[0].mxu0
    %v216 = vadd.f32 %v143, %v215
    %v217 = vpop.f32.mrb[0].mxu0
    %v218 = vadd.f32 %v143, %v217
    %219 = vdwg.mxu0
    %v222 = vcombine.low %v216, %v218
    %v224 = vunpack.c.l.s4 1966171168
    %v225 = vunpack.c.0.s8 %v224
    %v226 = vlaneseq
    %v227 = vshrl.u32 %v226, 7
    %v228 = vsub.s32 %v225, %v227
    %v229 = vrot.slane %v222, %v228
    %v231 = vunpack.c.l.s4 1966171168
    %v232 = vunpack.c.0.s8 %v231
    %v233 = vlaneseq
    %v234 = vshrl.u32 %v233, 7
    %v235 = vsub.s32 %v232, %v234
    %v236 = vrot.slane %v229, %v235
    %v238 = vlaneseq
    %vm239 = vcmp.ge.s32.totalorder %v238, 0
    %vm240 = vcmp.lt.s32.totalorder %v238, 256
    %vm241 = vmand %vm239, %vm240
    %s242 = scalar_lea.vmem [#allocation2], 1
    %243 = vst.msk [vmem:[%s242] ss:$8 sm:$0x3] %vm241, %v236
    %244 = vst.msk [vmem:[%s242] ss:$8 sm:$0x0] %vm241, %v236
    %v245 = vld [vmem:[#allocation2] sm:$0xff]
    %v246 = vld [vmem:[#allocation2 + $0x8] sm:$0xff]
    %v247 = vld [vmem:[%s1 + $0x20] sm:$0xff]
    %v248 = vld [vmem:[%s1 + $0x28] sm:$0xff]
    %v249 = vld [vmem:[%s1 + $0x30] sm:$0xff]
    %v250 = vld [vmem:[%s1 + $0x38] sm:$0xff]
    %v251 = vld [vmem:[%s1 + $0x40] sm:$0xff]
    %v252 = vld [vmem:[%s1 + $0x48] sm:$0xff]
    %v253 = vld [vmem:[%s1 + $0x50] sm:$0xff]
    %v254 = vld [vmem:[%s1 + $0x58] sm:$0xff]
    %v256 = vsel %vm28, %v247, 0
    %v259 = vsel %vm28, %v248, 0
    %v262 = vsel %vm28, %v249, 0
    %v265 = vsel %vm28, %v250, 0
    %v268 = vsel %vm28, %v251, 0
    %v271 = vsel %vm28, %v252, 0
    %v274 = vsel %vm28, %v253, 0
    %v277 = vsel %vm28, %v254, 0
    %279 = vmatprep.subr.mxu0 %v246
    %280 = vmatpush1.msra.mxu0 %v245
    %281 = vmatprep.subr.mxu0 0.0
    %282 = vmatpush1.msra.mxu0 0.0
    %283 = vmatprep.subr.mxu0 0.0
    %284 = vmatpush1.msra.mxu0 0.0
    %285 = vmatprep.subr.mxu0 0.0
    %286 = vmatpush1.msra.mxu0 0.0
    %287 = vmatprep.subr.mxu0 0.0
    %288 = vmatpush1.msra.mxu0 0.0
    %289 = vmatprep.subr.mxu0 0.0
    %290 = vmatpush1.msra.mxu0 0.0
    %291 = vmatprep.subr.mxu0 0.0
    %292 = vmatpush1.msra.mxu0 0.0
    %293 = vmatprep.subr.mxu0 0.0
    %294 = vmatpush1.msra.mxu0 0.0
    %295 = vmatprep.subr.mxu0 0.0
    %296 = vmatpush1.msra.mxu0 0.0
    %297 = vmatprep.subr.mxu0 0.0
    %298 = vmatpush1.msra.mxu0 0.0
    %299 = vmatprep.subr.mxu0 0.0
    %300 = vmatpush1.msra.mxu0 0.0
    %301 = vmatprep.subr.mxu0 0.0
    %302 = vmatpush1.msra.mxu0 0.0
    %303 = vmatprep.subr.mxu0 0.0
    %304 = vmatpush1.msra.mxu0 0.0
    %305 = vmatprep.subr.mxu0 0.0
    %306 = vmatpush1.msra.mxu0 0.0
    %307 = vmatprep.subr.mxu0 0.0
    %308 = vmatpush1.msra.mxu0 0.0
    %309 = vmatprep.subr.mxu0 0.0
    %310 = vmatpush1.msra.mxu0 0.0
    %311 = vmatprep.subr.mxu0 0.0
    %312 = vmatpush1.msra.mxu0 0.0
    %313 = vmatprep.subr.mxu0 0.0
    %314 = vmatpush1.msra.mxu0 0.0
    %315 = vmatprep.subr.mxu0 0.0
    %316 = vmatpush1.msra.mxu0 0.0
    %317 = vmatprep.subr.mxu0 0.0
    %318 = vmatpush1.msra.mxu0 0.0
    %319 = vmatprep.subr.mxu0 0.0
    %320 = vmatpush1.msra.mxu0 0.0
    %321 = vmatprep.subr.mxu0 0.0
    %322 = vmatpush1.msra.mxu0 0.0
    %323 = vmatprep.subr.mxu0 0.0
    %324 = vmatpush1.msra.mxu0 0.0
    %325 = vmatprep.subr.mxu0 0.0
    %326 = vmatpush1.msra.mxu0 0.0
    %327 = vmatprep.subr.mxu0 0.0
    %328 = vmatpush1.msra.mxu0 0.0
    %329 = vmatprep.subr.mxu0 0.0
    %330 = vmatpush1.msra.mxu0 0.0
    %331 = vmatprep.subr.mxu0 0.0
    %332 = vmatpush1.msra.mxu0 0.0
    %333 = vmatprep.subr.mxu0 0.0
    %334 = vmatpush1.msra.mxu0 0.0
    %335 = vmatprep.subr.mxu0 0.0
    %336 = vmatpush1.msra.mxu0 0.0
    %337 = vmatprep.subr.mxu0 0.0
    %338 = vmatpush1.msra.mxu0 0.0
    %339 = vmatprep.subr.mxu0 0.0
    %340 = vmatpush1.msra.mxu0 0.0
    %341 = vmatprep.subr.mxu0 0.0
    %342 = vmatpush1.msra.mxu0 0.0
    %343 = vmatprep.mubr.f32.mxu0 0.0
    %344 = vmatmul.mubr.f32.gmra.mrb[0].mxu0 %v256
    %v345 = vpop.f32.mrb[0].mxu0
    %v346 = vadd.f32 0.0, %v345
    %v347 = vpop.f32.mrb[0].mxu0
    %v348 = vadd.f32 0.0, %v347
    %349 = vmatprep.mubr.f32.mxu0 0.0
    %350 = vmatmul.mubr.f32.gmra.mrb[0].mxu0 %v259
    %v351 = vpop.f32.mrb[0].mxu0
    %v352 = vadd.f32 0.0, %v351
    %v353 = vpop.f32.mrb[0].mxu0
    %v354 = vadd.f32 0.0, %v353
    %355 = vmatprep.mubr.f32.mxu0 0.0
    %356 = vmatmul.mubr.f32.gmra.mrb[0].mxu0 %v262
    %v357 = vpop.f32.mrb[0].mxu0
    %v358 = vadd.f32 0.0, %v357
    %v359 = vpop.f32.mrb[0].mxu0
    %v360 = vadd.f32 0.0, %v359
    %361 = vmatprep.mubr.f32.mxu0 0.0
    %362 = vmatmul.mubr.f32.gmra.mrb[0].mxu0 %v265
    %v363 = vpop.f32.mrb[0].mxu0
    %v364 = vadd.f32 0.0, %v363
    %v365 = vpop.f32.mrb[0].mxu0
    %v366 = vadd.f32 0.0, %v365
    %367 = vmatprep.mubr.f32.mxu0 0.0
    %368 = vmatmul.mubr.f32.gmra.mrb[0].mxu0 %v268
    %v369 = vpop.f32.mrb[0].mxu0
    %v370 = vadd.f32 0.0, %v369
    %v371 = vpop.f32.mrb[0].mxu0
    %v372 = vadd.f32 0.0, %v371
    %373 = vmatprep.mubr.f32.mxu0 0.0
    %374 = vmatmul.mubr.f32.gmra.mrb[0].mxu0 %v271
    %v375 = vpop.f32.mrb[0].mxu0
    %v376 = vadd.f32 0.0, %v375
    %v377 = vpop.f32.mrb[0].mxu0
    %v378 = vadd.f32 0.0, %v377
    %379 = vmatprep.mubr.f32.mxu0 0.0
    %380 = vmatmul.mubr.f32.gmra.mrb[0].mxu0 %v274
    %v381 = vpop.f32.mrb[0].mxu0
    %v382 = vadd.f32 0.0, %v381
    %v383 = vpop.f32.mrb[0].mxu0
    %v384 = vadd.f32 0.0, %v383
    %385 = vmatprep.mubr.f32.mxu0 0.0
    %386 = vmatmul.mubr.f32.gmra.mrb[0].mxu0 %v277
    %v387 = vpop.f32.mrb[0].mxu0
    %v388 = vadd.f32 0.0, %v387
    %v389 = vpop.f32.mrb[0].mxu0
    %v390 = vadd.f32 0.0, %v389
    %391 = vdwg.mxu0
    %v392 = vmax.f32 %v346, 0.0
    %v393 = vmax.f32 %v348, 0.0
    %v394 = vmax.f32 %v352, 0.0
    %v395 = vmax.f32 %v354, 0.0
    %v396 = vmax.f32 %v358, 0.0
    %v397 = vmax.f32 %v360, 0.0
    %v398 = vmax.f32 %v364, 0.0
    %v399 = vmax.f32 %v366, 0.0
    %v400 = vmax.f32 %v370, 0.0
    %v401 = vmax.f32 %v372, 0.0
    %v402 = vmax.f32 %v376, 0.0
    %v403 = vmax.f32 %v378, 0.0
    %v404 = vmax.f32 %v382, 0.0
    %v405 = vmax.f32 %v384, 0.0
    %v406 = vmax.f32 %v388, 0.0
    %v407 = vmax.f32 %v390, 0.0
    %v408 = vld [vmem:[%s2 + $0x1] sm:$0x3]
    %v409 = vld [vmem:[%s3 + $0x1] sm:$0x3]
    %411 = vset.pattern.permute.xlu0 0
    %412 = vperm.xlu0 %411, %v409
    %v413 = vpop.permute.xlu0 %412
    %vm415 = vcmask 523264
    %v417 = vsel %vm415, %v408, 0
    %419 = vmatprep.subr.mxu0 %v393
    %420 = vmatpush1.msra.mxu0 %v392
    %421 = vmatprep.subr.mxu0 %v395
    %422 = vmatpush1.msra.mxu0 %v394
    %423 = vmatprep.subr.mxu0 %v397
    %424 = vmatpush1.msra.mxu0 %v396
    %425 = vmatprep.subr.mxu0 %v399
    %426 = vmatpush1.msra.mxu0 %v398
    %427 = vmatprep.subr.mxu0 %v401
    %428 = vmatpush1.msra.mxu0 %v400
    %429 = vmatprep.subr.mxu0 %v403
    %430 = vmatpush1.msra.mxu0 %v402
    %431 = vmatprep.subr.mxu0 %v405
    %432 = vmatpush1.msra.mxu0 %v404
    %433 = vmatprep.subr.mxu0 %v407
    %434 = vmatpush1.msra.mxu0 %v406
    %435 = vmatprep.subr.mxu0 0.0
    %436 = vmatpush1.msra.mxu0 0.0
    %437 = vmatprep.subr.mxu0 0.0
    %438 = vmatpush1.msra.mxu0 0.0
    %439 = vmatprep.subr.mxu0 0.0
    %440 = vmatpush1.msra.mxu0 0.0
    %441 = vmatprep.subr.mxu0 0.0
    %442 = vmatpush1.msra.mxu0 0.0
    %443 = vmatprep.subr.mxu0 0.0
    %444 = vmatpush1.msra.mxu0 0.0
    %445 = vmatprep.subr.mxu0 0.0
    %446 = vmatpush1.msra.mxu0 0.0
    %447 = vmatprep.subr.mxu0 0.0
    %448 = vmatpush1.msra.mxu0 0.0
    %449 = vmatprep.subr.mxu0 0.0
    %450 = vmatpush1.msra.mxu0 0.0
    %451 = vmatprep.subr.mxu0 0.0
    %452 = vmatpush1.msra.mxu0 0.0
    %453 = vmatprep.subr.mxu0 0.0
    %454 = vmatpush1.msra.mxu0 0.0
    %455 = vmatprep.subr.mxu0 0.0
    %456 = vmatpush1.msra.mxu0 0.0
    %457 = vmatprep.subr.mxu0 0.0
    %458 = vmatpush1.msra.mxu0 0.0
    %459 = vmatprep.subr.mxu0 0.0
    %460 = vmatpush1.msra.mxu0 0.0
    %461 = vmatprep.subr.mxu0 0.0
    %462 = vmatpush1.msra.mxu0 0.0
    %463 = vmatprep.subr.mxu0 0.0
    %464 = vmatpush1.msra.mxu0 0.0
    %465 = vmatprep.subr.mxu0 0.0
    %466 = vmatpush1.msra.mxu0 0.0
    %467 = vmatprep.subr.mxu0 0.0
    %468 = vmatpush1.msra.mxu0 0.0
    %469 = vmatprep.subr.mxu0 0.0
    %470 = vmatpush1.msra.mxu0 0.0
    %471 = vmatprep.subr.mxu0 0.0
    %472 = vmatpush1.msra.mxu0 0.0
    %473 = vmatprep.subr.mxu0 0.0
    %474 = vmatpush1.msra.mxu0 0.0
    %475 = vmatprep.subr.mxu0 0.0
    %476 = vmatpush1.msra.mxu0 0.0
    %477 = vmatprep.subr.mxu0 0.0
    %478 = vmatpush1.msra.mxu0 0.0
    %479 = vmatprep.subr.mxu0 0.0
    %480 = vmatpush1.msra.mxu0 0.0
    %481 = vmatprep.subr.mxu0 0.0
    %482 = vmatpush1.msra.mxu0 0.0
    %483 = vmatprep.mubr.f32.mxu0 0.0
    %484 = vmatmul.mubr.f32.gmra.mrb[0].mxu0 %v417
    %v485 = vpop.f32.mrb[0].mxu0
    %v486 = vadd.f32 %v413, %v485
    %v487 = vpop.f32.mrb[0].mxu0
    %v488 = vadd.f32 %v413, %v487
    %489 = vdwg.mxu0
    %v492 = vrot.slane %v486, 6
    %v493 = vrot.slane %v488, 6
    %496 = vst [vmem:[#allocation2] sm:$0xc] %v492
    %497 = vst [vmem:[#allocation2 + $0x8] sm:$0xc] %v493
    %v498 = vld [vmem:[#allocation2] sm:$0xff]
    %v499 = vld [vmem:[#allocation2 + $0x8] sm:$0xff]
    %v500 = vld [vmem:[%s1 + $0x60] sm:$0xff]
    %v501 = vld [vmem:[%s1 + $0x68] sm:$0xff]
    %v502 = vld [vmem:[%s1 + $0x70] sm:$0xff]
    %v503 = vld [vmem:[%s1 + $0x78] sm:$0xff]
    %v505 = vsel %vm28, %v500, 0
    %v508 = vsel %vm28, %v501, 0
    %v511 = vsel %vm28, %v502, 0
    %v514 = vsel %vm28, %v503, 0
    %516 = vmatprep.subr.mxu0 %v499
    %517 = vmatpush1.msra.mxu0 %v498
    %518 = vmatprep.subr.mxu0 0.0
    %519 = vmatpush1.msra.mxu0 0.0
    %520 = vmatprep.subr.mxu0 0.0
    %521 = vmatpush1.msra.mxu0 0.0
    %522 = vmatprep.subr.mxu0 0.0
    %523 = vmatpush1.msra.mxu0 0.0
    %524 = vmatprep.subr.mxu0 0.0
    %525 = vmatpush1.msra.mxu0 0.0
    %526 = vmatprep.subr.mxu0 0.0
    %527 = vmatpush1.msra.mxu0 0.0
    %528 = vmatprep.subr.mxu0 0.0
    %529 = vmatpush1.msra.mxu0 0.0
    %530 = vmatprep.subr.mxu0 0.0
    %531 = vmatpush1.msra.mxu0 0.0
    %532 = vmatprep.subr.mxu0 0.0
    %533 = vmatpush1.msra.mxu0 0.0
    %534 = vmatprep.subr.mxu0 0.0
    %535 = vmatpush1.msra.mxu0 0.0
    %536 = vmatprep.subr.mxu0 0.0
    %537 = vmatpush1.msra.mxu0 0.0
    %538 = vmatprep.subr.mxu0 0.0
    %539 = vmatpush1.msra.mxu0 0.0
    %540 = vmatprep.subr.mxu0 0.0
    %541 = vmatpush1.msra.mxu0 0.0
    %542 = vmatprep.subr.mxu0 0.0
    %543 = vmatpush1.msra.mxu0 0.0
    %544 = vmatprep.subr.mxu0 0.0
    %545 = vmatpush1.msra.mxu0 0.0
    %546 = vmatprep.subr.mxu0 0.0
    %547 = vmatpush1.msra.mxu0 0.0
    %548 = vmatprep.subr.mxu0 0.0
    %549 = vmatpush1.msra.mxu0 0.0
    %550 = vmatprep.subr.mxu0 0.0
    %551 = vmatpush1.msra.mxu0 0.0
    %552 = vmatprep.subr.mxu0 0.0
    %553 = vmatpush1.msra.mxu0 0.0
    %554 = vmatprep.subr.mxu0 0.0
    %555 = vmatpush1.msra.mxu0 0.0
    %556 = vmatprep.subr.mxu0 0.0
    %557 = vmatpush1.msra.mxu0 0.0
    %558 = vmatprep.subr.mxu0 0.0
    %559 = vmatpush1.msra.mxu0 0.0
    %560 = vmatprep.subr.mxu0 0.0
    %561 = vmatpush1.msra.mxu0 0.0
    %562 = vmatprep.subr.mxu0 0.0
    %563 = vmatpush1.msra.mxu0 0.0
    %564 = vmatprep.subr.mxu0 0.0
    %565 = vmatpush1.msra.mxu0 0.0
    %566 = vmatprep.subr.mxu0 0.0
    %567 = vmatpush1.msra.mxu0 0.0
    %568 = vmatprep.subr.mxu0 0.0
    %569 = vmatpush1.msra.mxu0 0.0
    %570 = vmatprep.subr.mxu0 0.0
    %571 = vmatpush1.msra.mxu0 0.0
    %572 = vmatprep.subr.mxu0 0.0
    %573 = vmatpush1.msra.mxu0 0.0
    %574 = vmatprep.subr.mxu0 0.0
    %575 = vmatpush1.msra.mxu0 0.0
    %576 = vmatprep.subr.mxu0 0.0
    %577 = vmatpush1.msra.mxu0 0.0
    %578 = vmatprep.subr.mxu0 0.0
    %579 = vmatpush1.msra.mxu0 0.0
    %580 = vmatprep.mubr.f32.mxu0 0.0
    %581 = vmatmul.mubr.f32.gmra.mrb[0].mxu0 %v505
    %v582 = vpop.f32.mrb[0].mxu0
    %v583 = vadd.f32 0.0, %v582
    %v584 = vpop.f32.mrb[0].mxu0
    %v585 = vadd.f32 0.0, %v584
    %586 = vmatprep.mubr.f32.mxu0 0.0
    %587 = vmatmul.mubr.f32.gmra.mrb[0].mxu0 %v508
    %v588 = vpop.f32.mrb[0].mxu0
    %v589 = vadd.f32 0.0, %v588
    %v590 = vpop.f32.mrb[0].mxu0
    %v591 = vadd.f32 0.0, %v590
    %592 = vmatprep.mubr.f32.mxu0 0.0
    %593 = vmatmul.mubr.f32.gmra.mrb[0].mxu0 %v511
    %v594 = vpop.f32.mrb[0].mxu0
    %v595 = vadd.f32 0.0, %v594
    %v596 = vpop.f32.mrb[0].mxu0
    %v597 = vadd.f32 0.0, %v596
    %598 = vmatprep.mubr.f32.mxu0 0.0
    %599 = vmatmul.mubr.f32.gmra.mrb[0].mxu0 %v514
    %v600 = vpop.f32.mrb[0].mxu0
    %v601 = vadd.f32 0.0, %v600
    %v602 = vpop.f32.mrb[0].mxu0
    %v603 = vadd.f32 0.0, %v602
    %604 = vdwg.mxu0
    %v605 = vmax.f32 %v583, 0.0
    %v606 = vmax.f32 %v585, 0.0
    %v607 = vmax.f32 %v589, 0.0
    %v608 = vmax.f32 %v591, 0.0
    %v609 = vmax.f32 %v595, 0.0
    %v610 = vmax.f32 %v597, 0.0
    %v611 = vmax.f32 %v601, 0.0
    %v612 = vmax.f32 %v603, 0.0
    %v613 = vld [vmem:[%s2 + $0x3] sm:$0x1]
    %v614 = vld [vmem:[%s3 + $0x3] sm:$0x1]
    %616 = vset.pattern.permute.xlu0 0
    %617 = vperm.xlu0 %616, %v614
    %v618 = vpop.permute.xlu0 %617
    %v621 = vsel %vm145, %v613, 0
    %623 = vmatprep.subr.mxu0 %v606
    %624 = vmatpush1.msra.mxu0 %v605
    %625 = vmatprep.subr.mxu0 %v608
    %626 = vmatpush1.msra.mxu0 %v607
    %627 = vmatprep.subr.mxu0 %v610
    %628 = vmatpush1.msra.mxu0 %v609
    %629 = vmatprep.subr.mxu0 %v612
    %630 = vmatpush1.msra.mxu0 %v611
    %631 = vmatprep.subr.mxu0 0.0
    %632 = vmatpush1.msra.mxu0 0.0
    %633 = vmatprep.subr.mxu0 0.0
    %634 = vmatpush1.msra.mxu0 0.0
    %635 = vmatprep.subr.mxu0 0.0
    %636 = vmatpush1.msra.mxu0 0.0
    %637 = vmatprep.subr.mxu0 0.0
    %638 = vmatpush1.msra.mxu0 0.0
    %639 = vmatprep.subr.mxu0 0.0
    %640 = vmatpush1.msra.mxu0 0.0
    %641 = vmatprep.subr.mxu0 0.0
    %642 = vmatpush1.msra.mxu0 0.0
    %643 = vmatprep.subr.mxu0 0.0
    %644 = vmatpush1.msra.mxu0 0.0
    %645 = vmatprep.subr.mxu0 0.0
    %646 = vmatpush1.msra.mxu0 0.0
    %647 = vmatprep.subr.mxu0 0.0
    %648 = vmatpush1.msra.mxu0 0.0
    %649 = vmatprep.subr.mxu0 0.0
    %650 = vmatpush1.msra.mxu0 0.0
    %651 = vmatprep.subr.mxu0 0.0
    %652 = vmatpush1.msra.mxu0 0.0
    %653 = vmatprep.subr.mxu0 0.0
    %654 = vmatpush1.msra.mxu0 0.0
    %655 = vmatprep.subr.mxu0 0.0
    %656 = vmatpush1.msra.mxu0 0.0
    %657 = vmatprep.subr.mxu0 0.0
    %658 = vmatpush1.msra.mxu0 0.0
    %659 = vmatprep.subr.mxu0 0.0
    %660 = vmatpush1.msra.mxu0 0.0
    %661 = vmatprep.subr.mxu0 0.0
    %662 = vmatpush1.msra.mxu0 0.0
    %663 = vmatprep.subr.mxu0 0.0
    %664 = vmatpush1.msra.mxu0 0.0
    %665 = vmatprep.subr.mxu0 0.0
    %666 = vmatpush1.msra.mxu0 0.0
    %667 = vmatprep.subr.mxu0 0.0
    %668 = vmatpush1.msra.mxu0 0.0
    %669 = vmatprep.subr.mxu0 0.0
    %670 = vmatpush1.msra.mxu0 0.0
    %671 = vmatprep.subr.mxu0 0.0
    %672 = vmatpush1.msra.mxu0 0.0
    %673 = vmatprep.subr.mxu0 0.0
    %674 = vmatpush1.msra.mxu0 0.0
    %675 = vmatprep.subr.mxu0 0.0
    %676 = vmatpush1.msra.mxu0 0.0
    %677 = vmatprep.subr.mxu0 0.0
    %678 = vmatpush1.msra.mxu0 0.0
    %679 = vmatprep.subr.mxu0 0.0
    %680 = vmatpush1.msra.mxu0 0.0
    %681 = vmatprep.subr.mxu0 0.0
    %682 = vmatpush1.msra.mxu0 0.0
    %683 = vmatprep.subr.mxu0 0.0
    %684 = vmatpush1.msra.mxu0 0.0
    %685 = vmatprep.subr.mxu0 0.0
    %686 = vmatpush1.msra.mxu0 0.0
    %687 = vmatprep.mubr.f32.mxu0 0.0
    %688 = vmatmul.mubr.f32.gmra.mrb[0].mxu0 %v621
    %v689 = vpop.f32.mrb[0].mxu0
    %v690 = vadd.f32 %v618, %v689
    %v691 = vpop.f32.mrb[0].mxu0
    %v692 = vadd.f32 %v618, %v691
    %693 = vdwg.mxu0
    %v696 = vcombine.low %v690, %v692
    %v698 = vunpack.c.l.s4 1966171168
    %v699 = vunpack.c.0.s8 %v698
    %v700 = vlaneseq
    %v701 = vshrl.u32 %v700, 7
    %v702 = vsub.s32 %v699, %v701
    %v703 = vrot.slane %v696, %v702
    %v705 = vunpack.c.l.s4 1966171168
    %v706 = vunpack.c.0.s8 %v705
    %v707 = vlaneseq
    %v708 = vshrl.u32 %v707, 7
    %v709 = vsub.s32 %v706, %v708
    %v710 = vrot.slane %v703, %v709
    %s712 = scalar_lea.vmem [#allocation2], 4
    %713 = vst.msk [vmem:[%s712] ss:$8 sm:$0x3] %vm241, %v710
    %714 = vst.msk [vmem:[%s712] ss:$8 sm:$0x0] %vm241, %v710
    // Predicated region
    $region18: #{tpu_custom_call.1} parent=1 // pred_check
      _
    $region19: #{tpu_custom_call.1} parent=1 // pred_check_branch
      %716 = sbr.rel (0) target = $region21
    $region20: #{tpu_custom_call.1} parent=1 // pred_region
      %s718 = ssub.s32 256, 256
      %719 = vsyncadd [#allocation3], %s718
      %s721 = sshll.u32 [#allocation2], 4
      %s722 = int_to_ptr.vmem [resolvable:$true] %s721
      %724 = dma.vmem_to_hbm [thread:$0]  %s722, 256, %s4, [#allocation3]
    $region21: #{tpu_custom_call.1} parent=1 // pred_fallthru
      _
    // Predicated region
    $region22: #{tpu_custom_call.1} parent=1 // pred_check
      _
    $region23: #{tpu_custom_call.1} parent=1 // pred_check_branch
      %726 = sbr.rel (0) target = $region25
    $region24: #{tpu_custom_call.1} parent=1 // pred_region
      %727 = dma.done [#allocation3], 256
    $region25: #{tpu_custom_call.1} parent=1 // pred_fallthru
      _
    %728 = vsyncpa [#allocation3], 1

</llo_original>
